<compile_context>
chip_gen: v6e
topology: v6e:2x2x1
jax: 0.10.0
libtpu: 0.0.40
codegen_flags: <defaults>
</compile_context>

<pallas_src>
import functools

import jax
import jax.numpy as jnp
from jax.experimental import pallas as pl
from jax.experimental.pallas import tpu as pltpu

_LANE = 128        # hidden feature dims padded to the lane width
_MAX_TB = 2048     # max rows of x per grid step
_MIN_CHUNK = 128   # min rows per in-kernel sub-chunk (keeps the MXU fed)


def _round_up(n, m):
    return ((n + m - 1) // m) * m


def _cdiv(a, b):
    return -(-a // b)


def _eup_has_bf16():
    """v6e / v7x EUP+VPU have a bf16 path; v2–v5 do not."""
    try:
        kind = jax.devices()[0].device_kind.lower()
    except Exception:
        return False
    return not any(v in kind for v in ("v2", "v3", "v4", "v5"))


def _sigmoid(h, act_dtype):
    # sigmoid(h) == 0.5 * tanh(0.5 * h) + 0.5  -> a single EUP transcendental
    # per element (instead of exp + reciprocal); the mul/adds ride the VPU.
    t = jnp.tanh((h * 0.5).astype(act_dtype))
    return t * 0.5 + 0.5


def _ann_kernel(x_ref, w1_ref, b1_ref, w2_ref, b2_ref, w3_ref, b3_ref, o_ref,
                *, act_dtype, n_chunks):
    """One batch tile of sigmoid(fc3(sigmoid(fc2(sigmoid(fc1(x))))))."""
    wdt = w1_ref.dtype                        # MXU input dtype (f32 or bf16)
    tb = x_ref.shape[0]
    cs = tb // n_chunks
    # Static unroll over row sub-chunks: the scheduler can overlap the MXU
    # matmuls of chunk c+1 with the EUP activations of chunk c.
    for c in range(n_chunks):
        rows = pl.ds(c * cs, cs)
        xc = x_ref[rows, :].astype(wdt)       # in-kernel cast, no HBM round trip
        h = jnp.dot(xc, w1_ref[...], preferred_element_type=jnp.float32)
        h = _sigmoid(h + b1_ref[...], act_dtype).astype(wdt)
        h = jnp.dot(h, w2_ref[...], preferred_element_type=jnp.float32)
        h = _sigmoid(h + b2_ref[...], act_dtype).astype(wdt)
        h = jnp.dot(h, w3_ref[...], preferred_element_type=jnp.float32)
        o_ref[rows, :] = _sigmoid(h + b3_ref[...], jnp.float32).astype(o_ref.dtype)


def prepare_kernel_params(params, use_bf16=True):
    """One-time glue outside the hot path: transpose PyTorch-layout weights to
    [in, out] and zero-pad ONLY the hidden feature dims to a multiple of 128.
    fc1 fan_in == num_inputs (x streams unpadded) and fc3 fan_out ==
    num_outputs (narrow output stream).  Weights optionally bf16 (MXU inputs);
    biases stay f32 for the f32 epilogue.  Zero padding is exact: padded
    hidden units give sigmoid(0)=0.5 but all their outgoing weight rows are 0."""
    wdt = jnp.bfloat16 if use_bf16 else jnp.float32
    num_hidden = params["w1"].shape[0]
    hpad = _round_up(num_hidden, _LANE) - num_hidden

    w1 = params["w1"].astype(jnp.float32).T          # [Ni, H]
    w2 = params["w2"].astype(jnp.float32).T          # [H, H]
    w3 = params["w3"].astype(jnp.float32).T          # [H, No]

    w1t = jnp.pad(w1, ((0, 0), (0, hpad))).astype(wdt)
    w2t = jnp.pad(w2, ((0, hpad), (0, hpad))).astype(wdt)
    w3t = jnp.pad(w3, ((0, hpad), (0, 0))).astype(wdt)
    b1 = jnp.pad(params["b1"].astype(jnp.float32)[None, :], ((0, 0), (0, hpad)))
    b2 = jnp.pad(params["b2"].astype(jnp.float32)[None, :], ((0, 0), (0, hpad)))
    b3 = params["b3"].astype(jnp.float32)[None, :]
    return {"w1t": w1t, "b1": b1, "w2t": w2t, "b2": b2, "w3t": w3t, "b3": b3}


@jax.jit
def ann_forward(x, prep):
    """x: [B, num_inputs] f32; prep: output of prepare_kernel_params."""
    w1t, b1 = prep["w1t"], prep["b1"]
    w2t, b2 = prep["w2t"], prep["b2"]
    w3t, b3 = prep["w3t"], prep["b3"]

    B, ni = x.shape
    hp = w2t.shape[0]
    no = w3t.shape[1]
    wdt = w1t.dtype
    use_bf16 = jnp.dtype(wdt) == jnp.bfloat16

    # bf16 transcendentals where the EUP supports them (v6e/v7x); f32 on v5e.
    act_dtype = jnp.bfloat16 if (use_bf16 and _eup_has_bf16()) else jnp.float32

    # ---- batch tiling (all static at trace time) ----
    sub = 16 if use_bf16 else 8              # match the native (sublane, 128) tile
    n_tiles = _cdiv(B, _MAX_TB)
    if B >= 2 * _MIN_CHUNK:
        # v7x has 2 TensorCores: give the "parallel" grid >= 2 (even) steps.
        n_tiles = max(n_tiles, 2)
        if n_tiles % 2:
            n_tiles += 1
    tb = _round_up(_cdiv(B, n_tiles), sub)   # minimal-padding tile size
    if tb >= 4 * _MIN_CHUNK:
        tb = _round_up(tb, 4 * sub)          # make tb splittable 4 ways
    elif tb >= 2 * _MIN_CHUNK:
        tb = _round_up(tb, 2 * sub)
    b_pad = _round_up(B, tb)

    n_chunks = 1
    for c in (4, 2):
        if tb % c == 0 and (tb // c) % sub == 0 and tb // c >= _MIN_CHUNK:
            n_chunks = c
            break

    # Only batch rows are ever padded (features stream at their true width).
    xp = x if b_pad == B else jnp.pad(x, ((0, b_pad - B), (0, 0)))

    itemsize = jnp.dtype(wdt).itemsize
    cost = pl.CostEstimate(
        flops=2 * b_pad * (ni * hp + hp * hp + hp * no),
        transcendentals=b_pad * (2 * hp + no),
        bytes_accessed=(xp.size * x.dtype.itemsize
                        + (w1t.size + w2t.size + w3t.size) * itemsize
                        + (b1.size + b2.size + b3.size) * 4
                        + b_pad * no * 4),
    )

    def resident(shape):
        # Constant index_map -> DMA'd once, stays VMEM-resident across steps.
        return pl.BlockSpec(shape, lambda i: (0, 0))

    kernel = functools.partial(_ann_kernel, act_dtype=act_dtype,
                               n_chunks=n_chunks)

    out = pl.pallas_call(
        kernel,
        out_shape=jax.ShapeDtypeStruct((b_pad, no), jnp.float32),
        grid=(b_pad // tb,),
        in_specs=[
            pl.BlockSpec((tb, ni), lambda i: (i, 0)),   # x streams over batch
            resident((ni, hp)), resident((1, hp)),
            resident((hp, hp)), resident((1, hp)),
            resident((hp, no)), resident((1, no)),
        ],
        out_specs=pl.BlockSpec((tb, no), lambda i: (i, 0)),
        compiler_params=pltpu.CompilerParams(
            dimension_semantics=("parallel",),   # shard batch tiles across TCs
        ),
        cost_estimate=cost,
    )(xp, w1t, b1, w2t, b2, w3t, b3)

    return out if b_pad == B else out[:B]


def init_params(key, num_inputs, num_hidden, num_outputs):
    """Deterministic init mimicking nn.Linear's U(-1/sqrt(fan_in), 1/sqrt(fan_in)),
    stored in PyTorch layout (w: [out, in], b: [out])."""
    keys = jax.random.split(key, 6)

    def linear(kw, kb, fan_in, fan_out):
        bound = 1.0 / jnp.sqrt(jnp.float32(fan_in))
        w = jax.random.uniform(kw, (fan_out, fan_in), jnp.float32, -bound, bound)
        b = jax.random.uniform(kb, (fan_out,), jnp.float32, -bound, bound)
        return w, b

    w1, b1 = linear(keys[0], keys[1], num_inputs, num_hidden)
    w2, b2 = linear(keys[2], keys[3], num_hidden, num_hidden)
    w3, b3 = linear(keys[4], keys[5], num_hidden, num_outputs)
    return {"w1": w1, "b1": b1, "w2": w2, "b2": b2, "w3": w3, "b3": b3}


def ann_forward_ref(x, params):
    """Pure-JAX reference matching the PyTorch forward pass."""
    h = jax.nn.sigmoid(x @ params["w1"].T + params["b1"])
    h = jax.nn.sigmoid(h @ params["w2"].T + params["b2"])
    return jax.nn.sigmoid(h @ params["w3"].T + params["b3"])


# TODO(synk): ANN.add_neurons / add_neurons (random & GradMax-SVD structural
# growth) is host-side parameter surgery on weights/gradients, not a device
# kernel; it is intentionally not translated.

if __name__ == "__main__":
    num_inputs, num_hidden, num_outputs = 32, 32, 16
    batch = 8

    key = jax.random.PRNGKey(0)
    k_params, k_x = jax.random.split(key)

    params = init_params(k_params, num_inputs, num_hidden, num_outputs)
    x = jax.random.normal(k_x, (batch, num_inputs), jnp.float32)

    ref = ann_forward_ref(x, params)

    # f32 path: matches the reference tightly (tanh-form sigmoid, f32 accum).
    prep_f32 = prepare_kernel_params(params, use_bf16=False)
    out = ann_forward(x, prep_f32)
    jax.block_until_ready(out)
    assert out.shape == (batch, num_outputs)
    assert jnp.allclose(out, ref, atol=2e-5, rtol=2e-5)

    # bf16-MXU-input path (f32 accumulation, bf16 EUP on v6e/v7x): looser tol.
    prep_bf16 = prepare_kernel_params(params, use_bf16=True)
    out_bf16 = ann_forward(x, prep_bf16)
    jax.block_until_ready(out_bf16)
    assert out_bf16.shape == (batch, num_outputs)
    assert jnp.allclose(out_bf16, ref, atol=3e-2, rtol=3e-2)

    print("KERNEL_OK")
</pallas_src>

<mosaic_0001>
module attributes {stable_mosaic.version = 11 : i64} {
  func.func @_ann_kernel(%arg0: i32, %arg1: memref<8x32xf32, #tpu.memory_space<vmem>>, %arg2: memref<32x128xf32, #tpu.memory_space<vmem>>, %arg3: memref<1x128xf32, #tpu.memory_space<vmem>>, %arg4: memref<128x128xf32, #tpu.memory_space<vmem>>, %arg5: memref<1x128xf32, #tpu.memory_space<vmem>>, %arg6: memref<128x16xf32, #tpu.memory_space<vmem>>, %arg7: memref<1x16xf32, #tpu.memory_space<vmem>>, %arg8: memref<8x16xf32, #tpu.memory_space<vmem>>) attributes {dimension_semantics = [#tpu.dimension_semantics<parallel>], iteration_bounds = array<i64: 1>, scalar_prefetch = 0 : i64, scratch_operands = 0 : i64, tpu.core_type = #tpu.core_type<tc>, window_params = [{transform_indices = @transform_0, window_bounds = array<i64: 8, 32>}, {pipeline_mode = #tpu.pipeline_mode<synchronous>, transform_indices = @transform_1, window_bounds = array<i64: 32, 128>}, {pipeline_mode = #tpu.pipeline_mode<synchronous>, transform_indices = @transform_2, window_bounds = array<i64: 1, 128>}, {pipeline_mode = #tpu.pipeline_mode<synchronous>, transform_indices = @transform_3, window_bounds = array<i64: 128, 128>}, {pipeline_mode = #tpu.pipeline_mode<synchronous>, transform_indices = @transform_4, window_bounds = array<i64: 1, 128>}, {pipeline_mode = #tpu.pipeline_mode<synchronous>, transform_indices = @transform_5, window_bounds = array<i64: 128, 16>}, {pipeline_mode = #tpu.pipeline_mode<synchronous>, transform_indices = @transform_6, window_bounds = array<i64: 1, 16>}, {transform_indices = @transform_7, window_bounds = array<i64: 8, 16>}]} {
    %c0 = arith.constant 0 : index
    %c0_0 = arith.constant 0 : index
    %0 = vector.load %arg1[%c0, %c0_0] : memref<8x32xf32, #tpu.memory_space<vmem>>, vector<8x32xf32>
    %c0_1 = arith.constant 0 : index
    %c0_2 = arith.constant 0 : index
    %1 = vector.load %arg2[%c0_1, %c0_2] : memref<32x128xf32, #tpu.memory_space<vmem>>, vector<32x128xf32>
    %cst = arith.constant dense<0.000000e+00> : vector<8x128xf32>
    %2 = tpu.matmul %0, %1, %cst {dimension_numbers = #tpu.dot_dimension_numbers<[1], [0], [0], [1], [0, 0, 1, 1], [], []>} : vector<8x32xf32>, vector<32x128xf32>, vector<8x128xf32> -> vector<8x128xf32>
    %c0_3 = arith.constant 0 : index
    %c0_4 = arith.constant 0 : index
    %3 = vector.load %arg3[%c0_3, %c0_4] : memref<1x128xf32, #tpu.memory_space<vmem>>, vector<1x128xf32>
    %4 = vector.broadcast %3 : vector<1x128xf32> to vector<8x128xf32>
    %5 = arith.addf %2, %4 : vector<8x128xf32>
    %cst_5 = arith.constant 5.000000e-01 : f32
    %6 = vector.broadcast %cst_5 : f32 to vector<8x128xf32>
    %7 = arith.mulf %5, %6 : vector<8x128xf32>
    %8 = math.tanh %7 : vector<8x128xf32>
    %cst_6 = arith.constant 5.000000e-01 : f32
    %9 = vector.broadcast %cst_6 : f32 to vector<8x128xf32>
    %10 = arith.mulf %8, %9 : vector<8x128xf32>
    %cst_7 = arith.constant 5.000000e-01 : f32
    %11 = vector.broadcast %cst_7 : f32 to vector<8x128xf32>
    %12 = arith.addf %10, %11 : vector<8x128xf32>
    %c0_8 = arith.constant 0 : index
    %c0_9 = arith.constant 0 : index
    %13 = vector.load %arg4[%c0_8, %c0_9] : memref<128x128xf32, #tpu.memory_space<vmem>>, vector<128x128xf32>
    %cst_10 = arith.constant dense<0.000000e+00> : vector<8x128xf32>
    %14 = tpu.matmul %12, %13, %cst_10 {dimension_numbers = #tpu.dot_dimension_numbers<[1], [0], [0], [1], [0, 0, 1, 1], [], []>} : vector<8x128xf32>, vector<128x128xf32>, vector<8x128xf32> -> vector<8x128xf32>
    %c0_11 = arith.constant 0 : index
    %c0_12 = arith.constant 0 : index
    %15 = vector.load %arg5[%c0_11, %c0_12] : memref<1x128xf32, #tpu.memory_space<vmem>>, vector<1x128xf32>
    %16 = vector.broadcast %15 : vector<1x128xf32> to vector<8x128xf32>
    %17 = arith.addf %14, %16 : vector<8x128xf32>
    %cst_13 = arith.constant 5.000000e-01 : f32
    %18 = vector.broadcast %cst_13 : f32 to vector<8x128xf32>
    %19 = arith.mulf %17, %18 : vector<8x128xf32>
    %20 = math.tanh %19 : vector<8x128xf32>
    %cst_14 = arith.constant 5.000000e-01 : f32
    %21 = vector.broadcast %cst_14 : f32 to vector<8x128xf32>
    %22 = arith.mulf %20, %21 : vector<8x128xf32>
    %cst_15 = arith.constant 5.000000e-01 : f32
    %23 = vector.broadcast %cst_15 : f32 to vector<8x128xf32>
    %24 = arith.addf %22, %23 : vector<8x128xf32>
    %c0_16 = arith.constant 0 : index
    %c0_17 = arith.constant 0 : index
    %25 = vector.load %arg6[%c0_16, %c0_17] : memref<128x16xf32, #tpu.memory_space<vmem>>, vector<128x16xf32>
    %cst_18 = arith.constant dense<0.000000e+00> : vector<8x16xf32>
    %26 = tpu.matmul %24, %25, %cst_18 {dimension_numbers = #tpu.dot_dimension_numbers<[1], [0], [0], [1], [0, 0, 1, 1], [], []>} : vector<8x128xf32>, vector<128x16xf32>, vector<8x16xf32> -> vector<8x16xf32>
    %c0_19 = arith.constant 0 : index
    %c0_20 = arith.constant 0 : index
    %27 = vector.load %arg7[%c0_19, %c0_20] : memref<1x16xf32, #tpu.memory_space<vmem>>, vector<1x16xf32>
    %28 = vector.broadcast %27 : vector<1x16xf32> to vector<8x16xf32>
    %29 = arith.addf %26, %28 : vector<8x16xf32>
    %cst_21 = arith.constant 5.000000e-01 : f32
    %30 = vector.broadcast %cst_21 : f32 to vector<8x16xf32>
    %31 = arith.mulf %29, %30 : vector<8x16xf32>
    %32 = math.tanh %31 : vector<8x16xf32>
    %cst_22 = arith.constant 5.000000e-01 : f32
    %33 = vector.broadcast %cst_22 : f32 to vector<8x16xf32>
    %34 = arith.mulf %32, %33 : vector<8x16xf32>
    %cst_23 = arith.constant 5.000000e-01 : f32
    %35 = vector.broadcast %cst_23 : f32 to vector<8x16xf32>
    %36 = arith.addf %34, %35 : vector<8x16xf32>
    %c0_24 = arith.constant 0 : index
    %c0_25 = arith.constant 0 : index
    %37 = vector.load %arg8[%c0_24, %c0_25] : memref<8x16xf32, #tpu.memory_space<vmem>>, vector<8x16xf32>
    tpu.vector_store %arg8[%c0_24, %c0_25], %36 {strides = array<i32>} : memref<8x16xf32, #tpu.memory_space<vmem>>, vector<8x16xf32>,
    return
  }
  func.func @transform_0(%arg0: i32) -> (i32, i32) {
    %c0_i32 = arith.constant 0 : i32
    %c0_i32_0 = arith.constant 0 : i32
    return %arg0, %c0_i32 : i32, i32
  }
  func.func @transform_1(%arg0: i32) -> (i32, i32) {
    %c0_i32 = arith.constant 0 : i32
    %c0_i32_0 = arith.constant 0 : i32
    %c0_i32_1 = arith.constant 0 : i32
    return %c0_i32, %c0_i32_0 : i32, i32
  }
  func.func @transform_2(%arg0: i32) -> (i32, i32) {
    %c0_i32 = arith.constant 0 : i32
    %c0_i32_0 = arith.constant 0 : i32
    %c0_i32_1 = arith.constant 0 : i32
    return %c0_i32, %c0_i32_0 : i32, i32
  }
  func.func @transform_3(%arg0: i32) -> (i32, i32) {
    %c0_i32 = arith.constant 0 : i32
    %c0_i32_0 = arith.constant 0 : i32
    %c0_i32_1 = arith.constant 0 : i32
    return %c0_i32, %c0_i32_0 : i32, i32
  }
  func.func @transform_4(%arg0: i32) -> (i32, i32) {
    %c0_i32 = arith.constant 0 : i32
    %c0_i32_0 = arith.constant 0 : i32
    %c0_i32_1 = arith.constant 0 : i32
    return %c0_i32, %c0_i32_0 : i32, i32
  }
  func.func @transform_5(%arg0: i32) -> (i32, i32) {
    %c0_i32 = arith.constant 0 : i32
    %c0_i32_0 = arith.constant 0 : i32
    %c0_i32_1 = arith.constant 0 : i32
    return %c0_i32, %c0_i32_0 : i32, i32
  }
  func.func @transform_6(%arg0: i32) -> (i32, i32) {
    %c0_i32 = arith.constant 0 : i32
    %c0_i32_0 = arith.constant 0 : i32
    %c0_i32_1 = arith.constant 0 : i32
    return %c0_i32, %c0_i32_0 : i32, i32
  }
  func.func @transform_7(%arg0: i32) -> (i32, i32) {
    %c0_i32 = arith.constant 0 : i32
    %c0_i32_0 = arith.constant 0 : i32
    return %arg0, %c0_i32 : i32, i32
  }
}

</mosaic_0001>

<llo_original>
// kernel: ann_forward.1
$region0: #{ann_forward.1}
  #allocation0 [shape = 'u32[]', space=smem, size = 0x4, offset = 0x4, fixed_abs, tag = 'smem constant byte address 0x4 - core index']
  #allocation1 [shape = 'u32[144,128]{1,0:T(1,128)}', space=vmem, size = 0x12000, scoped, tag = 'internal scratch']
  %s0 = inlined_call_operand.vmem [shape: f32[8,32], index: 0, kind: input, shape index: {}]
  %s1 = inlined_call_operand.hbm [shape: f32[32,128], index: 1, kind: input, shape index: {}]
  %s2 = inlined_call_operand.vmem [shape: f32[1,128], index: 2, kind: input, shape index: {}]
  %s3 = inlined_call_operand.vmem [shape: f32[128,128], index: 3, kind: input, shape index: {}]
  %s4 = inlined_call_operand.vmem [shape: f32[1,128], index: 4, kind: input, shape index: {}]
  %s5 = inlined_call_operand.vmem [shape: f32[128,16], index: 5, kind: input, shape index: {}]
  %s6 = inlined_call_operand.vmem [shape: f32[1,16], index: 6, kind: input, shape index: {}]
  %s7 = inlined_call_operand.hbm [shape: f32[8,16], index: 7, kind: output, shape index: {}]
  %s8 = sld [smem:[#allocation0]]
  $region42: #{ann_forward.1} parent=0
    _
  %s10 = ssub.s32 1, %s8
  %s11 = scalar_select 0, %s10, %s8
  $region1: #{ann_forward.1} parent=0
    #allocation2 [shape = 'u8[16384]{0}', space=vmem, size = 0x4000, scoped, tag = 'input window, operand 1, single buffered']
    #allocation3 [shape = 's32[1]{0}', space=sflag, size = 0x4, scoped, tag = 'scoped memory for ann_forward.1']
    #allocation4 [shape = 's32[1]{0}', space=sflag, size = 0x4, scoped, tag = 'scoped memory for ann_forward.1']
    #allocation5 [shape = 'u8[4096]{0}', space=vmem, size = 0x1000, scoped, tag = 'output window, operand 0, single buffered']
    %12 = vsyncpa [#allocation3], 0
    %13 = vsyncpa [#allocation4], 0
    // Predicated region
    $region2: #{ann_forward.1} parent=1 // pred_check
      _
    $region3: #{ann_forward.1} parent=1 // pred_check_branch
      %15 = sbr.rel (0) target = $region5
    $region4: #{ann_forward.1} parent=1 // pred_region
      _
    $region5: #{ann_forward.1} parent=1 // pred_fallthru
      _
    // Predicated region
    $region6: #{ann_forward.1} parent=1 // pred_check
      _
    $region7: #{ann_forward.1} parent=1 // pred_check_branch
      %17 = sbr.rel (0) target = $region9
    $region8: #{ann_forward.1} parent=1 // pred_region
      %s19 = ssub.s32 512, 512
      %20 = vsyncadd [#allocation3], %s19
      %s21 = sshll.u32 [#allocation2], 4
      %s22 = int_to_ptr.vmem [resolvable:$true] %s21
      %27 = dma.hbm_to_vmem [thread:$0]  %s1, 512, %s22, [#allocation3], 128, 128, 8
    $region9: #{ann_forward.1} parent=1 // pred_fallthru
      _
    // Predicated region
    $region10: #{ann_forward.1} parent=1 // pred_check
      _
    $region11: #{ann_forward.1} parent=1 // pred_check_branch
      %29 = sbr.rel (0) target = $region13
    $region12: #{ann_forward.1} parent=1 // pred_region
      _
    $region13: #{ann_forward.1} parent=1 // pred_fallthru
      _
    // Predicated region
    $region14: #{ann_forward.1} parent=1 // pred_check
      _
    $region15: #{ann_forward.1} parent=1 // pred_check_branch
      %31 = sbr.rel (0) target = $region17
    $region16: #{ann_forward.1} parent=1 // pred_region
      _
    $region17: #{ann_forward.1} parent=1 // pred_fallthru
      _
    // Predicated region
    $region18: #{ann_forward.1} parent=1 // pred_check
      _
    $region19: #{ann_forward.1} parent=1 // pred_check_branch
      %33 = sbr.rel (0) target = $region21
    $region20: #{ann_forward.1} parent=1 // pred_region
      _
    $region21: #{ann_forward.1} parent=1 // pred_fallthru
      _
    // Predicated region
    $region22: #{ann_forward.1} parent=1 // pred_check
      _
    $region23: #{ann_forward.1} parent=1 // pred_check_branch
      %35 = sbr.rel (0) target = $region25
    $region24: #{ann_forward.1} parent=1 // pred_region
      _
    $region25: #{ann_forward.1} parent=1 // pred_fallthru
      _
    // Predicated region
    $region26: #{ann_forward.1} parent=1 // pred_check
      _
    $region27: #{ann_forward.1} parent=1 // pred_check_branch
      %37 = sbr.rel (0) target = $region29
    $region28: #{ann_forward.1} parent=1 // pred_region
      _
    $region29: #{ann_forward.1} parent=1 // pred_fallthru
      _
    // Predicated region
    $region30: #{ann_forward.1} parent=1 // pred_check
      _
    $region31: #{ann_forward.1} parent=1 // pred_check_branch
      %39 = sbr.rel (0) target = $region33
    $region32: #{ann_forward.1} parent=1 // pred_region
      %40 = dma.done [#allocation3], 512
    $region33: #{ann_forward.1} parent=1 // pred_fallthru
      _
    %v41 = vld [vmem:[%s0] sm:$0xff]
    %v42 = vld [vmem:[#allocation2] sm:$0xff]
    %v43 = vld [vmem:[#allocation2 + $0x8] sm:$0xff]
    %v44 = vld [vmem:[#allocation2 + $0x10] sm:$0xff]
    %v45 = vld [vmem:[#allocation2 + $0x18] sm:$0xff]
    %v46 = vld [vmem:[%s2] sm:$0x1]
    %v48 = vlaneseq
    %v49 = vshrl.u32 %v48, 7
    %v50 = vsub.s32 0, %v49
    %v51 = vrot.slane %v46, %v50
    %vm53 = vcmask 261120
    %v55 = vsel %vm53, %v41, 0
    %57 = vmatprep.subr.mxu0 0.0
    %58 = vmatpush1.msra.mxu0 0.0
    %59 = vmatprep.subr.mxu0 0.0
    %60 = vmatpush1.msra.mxu0 0.0
    %61 = vmatprep.subr.mxu0 0.0
    %62 = vmatpush1.msra.mxu0 0.0
    %63 = vmatprep.subr.mxu0 0.0
    %64 = vmatpush1.msra.mxu0 0.0
    %65 = vmatprep.subr.mxu0 0.0
    %66 = vmatpush1.msra.mxu0 0.0
    %67 = vmatprep.subr.mxu0 0.0
    %68 = vmatpush1.msra.mxu0 0.0
    %69 = vmatprep.subr.mxu0 0.0
    %70 = vmatpush1.msra.mxu0 0.0
    %71 = vmatprep.subr.mxu0 0.0
    %72 = vmatpush1.msra.mxu0 0.0
    %73 = vmatprep.subr.mxu0 0.0
    %74 = vmatpush1.msra.mxu0 0.0
    %75 = vmatprep.subr.mxu0 0.0
    %76 = vmatpush1.msra.mxu0 0.0
    %77 = vmatprep.subr.mxu0 0.0
    %78 = vmatpush1.msra.mxu0 0.0
    %79 = vmatprep.subr.mxu0 0.0
    %80 = vmatpush1.msra.mxu0 0.0
    %81 = vmatprep.subr.mxu0 0.0
    %82 = vmatpush1.msra.mxu0 %v45
    %83 = vmatprep.subr.mxu0 0.0
    %84 = vmatpush1.msra.mxu0 %v44
    %85 = vmatprep.subr.mxu0 0.0
    %86 = vmatpush1.msra.mxu0 %v43
    %87 = vmatprep.subr.mxu0 0.0
    %88 = vmatpush1.msra.mxu0 %v42
    %89 = vmatprep.subr.mxu0 0.0
    %90 = vmatpush2.msra.mxu0 0.0
    %91 = vmatprep.subr.mxu0 0.0
    %92 = vmatpush2.msra.mxu0 0.0
    %93 = vmatprep.subr.mxu0 0.0
    %94 = vmatpush2.msra.mxu0 0.0
    %95 = vmatprep.subr.mxu0 0.0
    %96 = vmatpush2.msra.mxu0 0.0
    %97 = vmatprep.subr.mxu0 0.0
    %98 = vmatpush2.msra.mxu0 0.0
    %99 = vmatprep.subr.mxu0 0.0
    %100 = vmatpush2.msra.mxu0 0.0
    %101 = vmatprep.subr.mxu0 0.0
    %102 = vmatpush2.msra.mxu0 0.0
    %103 = vmatprep.subr.mxu0 0.0
    %104 = vmatpush2.msra.mxu0 0.0
    %105 = vmatprep.subr.mxu0 0.0
    %106 = vmatpush2.msra.mxu0 0.0
    %107 = vmatprep.subr.mxu0 0.0
    %108 = vmatpush2.msra.mxu0 0.0
    %109 = vmatprep.subr.mxu0 0.0
    %110 = vmatpush2.msra.mxu0 0.0
    %111 = vmatprep.subr.mxu0 0.0
    %112 = vmatpush2.msra.mxu0 0.0
    %113 = vmatprep.subr.mxu0 0.0
    %114 = vmatpush2.msra.mxu0 0.0
    %115 = vmatprep.subr.mxu0 0.0
    %116 = vmatpush2.msra.mxu0 0.0
    %117 = vmatprep.subr.mxu0 0.0
    %118 = vmatpush2.msra.mxu0 0.0
    %119 = vmatprep.subr.mxu0 0.0
    %120 = vmatpush2.msra.mxu0 0.0
    %121 = vmatprep.mubr.f32.mxu0 0.0
    %122 = vmatmul.mubr.f32.gmra.mxu0 %v55
    %v123 = vpop.f32.mrf.mxu0
    %v124 = vadd.f32 %v51, %v123
    %v125 = vpop.f32.mrf.mxu0
    %126 = vdwg.mxu0
    %v127 = vmul.f32 %v124, 0.5
    %v128 = vtanh.pop %v127
    %v129 = vmul.f32 %v128, 0.5
    %v130 = vadd.f32 %v129, 0.5
    %v131 = vld [vmem:[%s3] sm:$0xff]
    %v132 = vld [vmem:[%s3 + $0x8] sm:$0xff]
    %v133 = vld [vmem:[%s3 + $0x10] sm:$0xff]
    %v134 = vld [vmem:[%s3 + $0x18] sm:$0xff]
    %v135 = vld [vmem:[%s3 + $0x20] sm:$0xff]
    %v136 = vld [vmem:[%s3 + $0x28] sm:$0xff]
    %v137 = vld [vmem:[%s3 + $0x30] sm:$0xff]
    %v138 = vld [vmem:[%s3 + $0x38] sm:$0xff]
    %v139 = vld [vmem:[%s3 + $0x40] sm:$0xff]
    %v140 = vld [vmem:[%s3 + $0x48] sm:$0xff]
    %v141 = vld [vmem:[%s3 + $0x50] sm:$0xff]
    %v142 = vld [vmem:[%s3 + $0x58] sm:$0xff]
    %v143 = vld [vmem:[%s3 + $0x60] sm:$0xff]
    %v144 = vld [vmem:[%s3 + $0x68] sm:$0xff]
    %v145 = vld [vmem:[%s3 + $0x70] sm:$0xff]
    %v146 = vld [vmem:[%s3 + $0x78] sm:$0xff]
    %v147 = vld [vmem:[%s4] sm:$0x1]
    %v149 = vlaneseq
    %v150 = vshrl.u32 %v149, 7
    %v151 = vsub.s32 0, %v150
    %v152 = vrot.slane %v147, %v151
    %154 = vmatprep.subr.mxu0 0.0
    %155 = vmatpush1.msra.mxu0 %v146
    %156 = vmatprep.subr.mxu0 0.0
    %157 = vmatpush1.msra.mxu0 %v145
    %158 = vmatprep.subr.mxu0 0.0
    %159 = vmatpush1.msra.mxu0 %v144
    %160 = vmatprep.subr.mxu0 0.0
    %161 = vmatpush1.msra.mxu0 %v143
    %162 = vmatprep.subr.mxu0 0.0
    %163 = vmatpush1.msra.mxu0 %v142
    %164 = vmatprep.subr.mxu0 0.0
    %165 = vmatpush1.msra.mxu0 %v141
    %166 = vmatprep.subr.mxu0 0.0
    %167 = vmatpush1.msra.mxu0 %v140
    %168 = vmatprep.subr.mxu0 0.0
    %169 = vmatpush1.msra.mxu0 %v139
    %170 = vmatprep.subr.mxu0 0.0
    %171 = vmatpush1.msra.mxu0 %v138
    %172 = vmatprep.subr.mxu0 0.0
    %173 = vmatpush1.msra.mxu0 %v137
    %174 = vmatprep.subr.mxu0 0.0
    %175 = vmatpush1.msra.mxu0 %v136
    %176 = vmatprep.subr.mxu0 0.0
    %177 = vmatpush1.msra.mxu0 %v135
    %178 = vmatprep.subr.mxu0 0.0
    %179 = vmatpush1.msra.mxu0 %v134
    %180 = vmatprep.subr.mxu0 0.0
    %181 = vmatpush1.msra.mxu0 %v133
    %182 = vmatprep.subr.mxu0 0.0
    %183 = vmatpush1.msra.mxu0 %v132
    %184 = vmatprep.subr.mxu0 0.0
    %185 = vmatpush1.msra.mxu0 %v131
    %186 = vmatprep.subr.mxu0 0.0
    %187 = vmatpush2.msra.mxu0 0.0
    %188 = vmatprep.subr.mxu0 0.0
    %189 = vmatpush2.msra.mxu0 0.0
    %190 = vmatprep.subr.mxu0 0.0
    %191 = vmatpush2.msra.mxu0 0.0
    %192 = vmatprep.subr.mxu0 0.0
    %193 = vmatpush2.msra.mxu0 0.0
    %194 = vmatprep.subr.mxu0 0.0
    %195 = vmatpush2.msra.mxu0 0.0
    %196 = vmatprep.subr.mxu0 0.0
    %197 = vmatpush2.msra.mxu0 0.0
    %198 = vmatprep.subr.mxu0 0.0
    %199 = vmatpush2.msra.mxu0 0.0
    %200 = vmatprep.subr.mxu0 0.0
    %201 = vmatpush2.msra.mxu0 0.0
    %202 = vmatprep.subr.mxu0 0.0
    %203 = vmatpush2.msra.mxu0 0.0
    %204 = vmatprep.subr.mxu0 0.0
    %205 = vmatpush2.msra.mxu0 0.0
    %206 = vmatprep.subr.mxu0 0.0
    %207 = vmatpush2.msra.mxu0 0.0
    %208 = vmatprep.subr.mxu0 0.0
    %209 = vmatpush2.msra.mxu0 0.0
    %210 = vmatprep.subr.mxu0 0.0
    %211 = vmatpush2.msra.mxu0 0.0
    %212 = vmatprep.subr.mxu0 0.0
    %213 = vmatpush2.msra.mxu0 0.0
    %214 = vmatprep.subr.mxu0 0.0
    %215 = vmatpush2.msra.mxu0 0.0
    %216 = vmatprep.subr.mxu0 0.0
    %217 = vmatpush2.msra.mxu0 0.0
    %218 = vmatprep.mubr.f32.mxu0 0.0
    %219 = vmatmul.mubr.f32.gmra.mxu0 %v130
    %v220 = vpop.f32.mrf.mxu0
    %v221 = vadd.f32 %v152, %v220
    %v222 = vpop.f32.mrf.mxu0
    %223 = vdwg.mxu0
    %v224 = vmul.f32 %v221, 0.5
    %v225 = vtanh.pop %v224
    %v226 = vmul.f32 %v225, 0.5
    %v227 = vadd.f32 %v226, 0.5
    %v228 = vld [vmem:[%s5] sm:$0xff]
    %v229 = vld [vmem:[%s5 + $0x8] sm:$0xff]
    %v230 = vld [vmem:[%s5 + $0x10] sm:$0xff]
    %v231 = vld [vmem:[%s5 + $0x18] sm:$0xff]
    %v232 = vld [vmem:[%s5 + $0x20] sm:$0xff]
    %v233 = vld [vmem:[%s5 + $0x28] sm:$0xff]
    %v234 = vld [vmem:[%s5 + $0x30] sm:$0xff]
    %v235 = vld [vmem:[%s5 + $0x38] sm:$0xff]
    %v236 = vld [vmem:[%s5 + $0x40] sm:$0xff]
    %v237 = vld [vmem:[%s5 + $0x48] sm:$0xff]
    %v238 = vld [vmem:[%s5 + $0x50] sm:$0xff]
    %v239 = vld [vmem:[%s5 + $0x58] sm:$0xff]
    %v240 = vld [vmem:[%s5 + $0x60] sm:$0xff]
    %v241 = vld [vmem:[%s5 + $0x68] sm:$0xff]
    %v242 = vld [vmem:[%s5 + $0x70] sm:$0xff]
    %v243 = vld [vmem:[%s5 + $0x78] sm:$0xff]
    %v244 = vld [vmem:[%s6] sm:$0x1]
    %v246 = vlaneseq
    %v247 = vshrl.u32 %v246, 7
    %v248 = vsub.s32 0, %v247
    %v249 = vrot.slane %v244, %v248
    %251 = vmatprep.subr.mxu0 0.0
    %252 = vmatpush1.msra.mxu0 %v243
    %253 = vmatprep.subr.mxu0 0.0
    %254 = vmatpush1.msra.mxu0 %v242
    %255 = vmatprep.subr.mxu0 0.0
    %256 = vmatpush1.msra.mxu0 %v241
    %257 = vmatprep.subr.mxu0 0.0
    %258 = vmatpush1.msra.mxu0 %v240
    %259 = vmatprep.subr.mxu0 0.0
    %260 = vmatpush1.msra.mxu0 %v239
    %261 = vmatprep.subr.mxu0 0.0
    %262 = vmatpush1.msra.mxu0 %v238
    %263 = vmatprep.subr.mxu0 0.0
    %264 = vmatpush1.msra.mxu0 %v237
    %265 = vmatprep.subr.mxu0 0.0
    %266 = vmatpush1.msra.mxu0 %v236
    %267 = vmatprep.subr.mxu0 0.0
    %268 = vmatpush1.msra.mxu0 %v235
    %269 = vmatprep.subr.mxu0 0.0
    %270 = vmatpush1.msra.mxu0 %v234
    %271 = vmatprep.subr.mxu0 0.0
    %272 = vmatpush1.msra.mxu0 %v233
    %273 = vmatprep.subr.mxu0 0.0
    %274 = vmatpush1.msra.mxu0 %v232
    %275 = vmatprep.subr.mxu0 0.0
    %276 = vmatpush1.msra.mxu0 %v231
    %277 = vmatprep.subr.mxu0 0.0
    %278 = vmatpush1.msra.mxu0 %v230
    %279 = vmatprep.subr.mxu0 0.0
    %280 = vmatpush1.msra.mxu0 %v229
    %281 = vmatprep.subr.mxu0 0.0
    %282 = vmatpush1.msra.mxu0 %v228
    %283 = vmatprep.subr.mxu0 0.0
    %284 = vmatpush2.msra.mxu0 0.0
    %285 = vmatprep.subr.mxu0 0.0
    %286 = vmatpush2.msra.mxu0 0.0
    %287 = vmatprep.subr.mxu0 0.0
    %288 = vmatpush2.msra.mxu0 0.0
    %289 = vmatprep.subr.mxu0 0.0
    %290 = vmatpush2.msra.mxu0 0.0
    %291 = vmatprep.subr.mxu0 0.0
    %292 = vmatpush2.msra.mxu0 0.0
    %293 = vmatprep.subr.mxu0 0.0
    %294 = vmatpush2.msra.mxu0 0.0
    %295 = vmatprep.subr.mxu0 0.0
    %296 = vmatpush2.msra.mxu0 0.0
    %297 = vmatprep.subr.mxu0 0.0
    %298 = vmatpush2.msra.mxu0 0.0
    %299 = vmatprep.subr.mxu0 0.0
    %300 = vmatpush2.msra.mxu0 0.0
    %301 = vmatprep.subr.mxu0 0.0
    %302 = vmatpush2.msra.mxu0 0.0
    %303 = vmatprep.subr.mxu0 0.0
    %304 = vmatpush2.msra.mxu0 0.0
    %305 = vmatprep.subr.mxu0 0.0
    %306 = vmatpush2.msra.mxu0 0.0
    %307 = vmatprep.subr.mxu0 0.0
    %308 = vmatpush2.msra.mxu0 0.0
    %309 = vmatprep.subr.mxu0 0.0
    %310 = vmatpush2.msra.mxu0 0.0
    %311 = vmatprep.subr.mxu0 0.0
    %312 = vmatpush2.msra.mxu0 0.0
    %313 = vmatprep.subr.mxu0 0.0
    %314 = vmatpush2.msra.mxu0 0.0
    %315 = vmatprep.mubr.f32.mxu0 0.0
    %316 = vmatmul.mubr.f32.gmra.mxu0 %v227
    %v317 = vpop.f32.mrf.mxu0
    %v318 = vadd.f32 %v249, %v317
    %v319 = vpop.f32.mrf.mxu0
    %320 = vdwg.mxu0
    %v321 = vmul.f32 %v318, 0.5
    %v322 = vtanh.pop %v321
    %v323 = vmul.f32 %v322, 0.5
    %v324 = vadd.f32 %v323, 0.5
    %vm325 = vcmask 130048
    %326 = vst.msk [vmem:[#allocation5] sm:$0xff] %vm325, %v324
    // Predicated region
    $region34: #{ann_forward.1} parent=1 // pred_check
      _
    $region35: #{ann_forward.1} parent=1 // pred_check_branch
      %328 = sbr.rel (0) target = $region37
    $region36: #{ann_forward.1} parent=1 // pred_region
      %s330 = ssub.s32 128, 128
      %331 = vsyncadd [#allocation4], %s330
      %s333 = sshll.u32 [#allocation5], 4
      %s334 = int_to_ptr.vmem [resolvable:$true] %s333
      %336 = dma.vmem_to_hbm [thread:$0]  %s334, 128, %s7, [#allocation4]
    $region37: #{ann_forward.1} parent=1 // pred_fallthru
      _
    // Predicated region
    $region38: #{ann_forward.1} parent=1 // pred_check
      _
    $region39: #{ann_forward.1} parent=1 // pred_check_branch
      %338 = sbr.rel (0) target = $region41
    $region40: #{ann_forward.1} parent=1 // pred_region
      %339 = dma.done [#allocation4], 128
    $region41: #{ann_forward.1} parent=1 // pred_fallthru
      _
    %340 = vsyncpa [#allocation3], 1
    %341 = vsyncpa [#allocation4], 1

</llo_original>
